<compile_context>
chip_gen: v6e
topology: v6e:2x2x1
jax: 0.10.0
libtpu: 0.0.40
codegen_flags: <defaults>
</compile_context>

<pallas_src>
import jax
import jax.numpy as jnp
from jax.experimental import pallas as pl
from jax.experimental.pallas import tpu as pltpu


# --------------------------------------------------------------------------- kernel
def _self_attn_rewire_kernel(x_ref, w_ref, b_ref, o_ref):
    H = o_ref.shape[-1]

    # Activations stay in their compute dtype (bf16 stays bf16) -> fast MXU path;
    # accumulation is forced to f32 via preferred_element_type.
    x = x_ref[...]                                          # (TB, D1+D2)

    # Single block-diagonal MXU push: [ v | k | q ] = x @ W + b   (TB, 3H), f32.
    proj = jnp.dot(x, w_ref[...], preferred_element_type=jnp.float32) + b_ref[...]

    v = proj[:, :H]                                         # acti_v = Identity; lane-aligned with output
    k = jnp.tanh(proj[:, H:2 * H])                          # acti = Tanh
    q = jnp.tanh(proj[:, 2 * H:])                           # acti = Tanh

    qk = q * k                                              # bounded in (-1, 1)
    # Softmax WITHOUT max-subtraction: safe ONLY because qk is tanh*tanh bounded,
    # so exp(qk) <= e.  Do not remove a tanh without restoring the max trick.
    e = jnp.exp(qk)
    s = jnp.sum(e, axis=-1, keepdims=True)
    sm = e * pl.reciprocal(s, approx=True)                  # EUP vrcp: off the VALU path

    o_ref[...] = (sm * v).astype(o_ref.dtype)


# ------------------------------------------------------------------------ tiling
def _vmem_budget():
    """Conservative VMEM budget for the batch tile, derived from the actual chip."""
    cap = 128 << 20
    try:
        cap = int(getattr(pltpu.get_tpu_info(), "vmem_capacity_bytes", cap))
    except Exception:
        pass
    # Stay well under the default scoped-VMEM limit on every generation
    # (16 MiB v5e, 32 MiB v6e/v7x) so no vmem_limit_bytes override is needed.
    return min(cap // 8, 12 << 20)


def _choose_tile_b(B, Din, H, in_itemsize, out_itemsize, vmem_budget):
    per_row = (2 * Din * in_itemsize      # double-buffered fused-input tile
               + 2 * H * out_itemsize     # double-buffered output tile
               + 14 * H * 4)              # f32 intermediates (proj=3H, q, k, v, qk, e, sm, ...)
    tile = vmem_budget // max(per_row, 1)
    tile = min(tile, 2048)                # measured gains flatten past ~1-2K rows
    # Guarantee >= 2 grid steps so ("parallel",) spreads the batch across both
    # TensorCores on v7x.  On 1-TC parts this costs one extra ~0.35us step.
    half = (-(-B // 2) + 7) // 8 * 8      # round8(ceil(B / 2))
    tile = min(tile, half)
    tile = min(tile, (B + 7) // 8 * 8)    # never exceed the (rounded-up) batch
    return max(8, (tile // 8) * 8)        # sublane multiple


# --------------------------------------------------------------------- param prep
def fuse_params(params, compute_dtype=None):
    """One-time fusion of the three Linear layers into a block-diagonal weight.

    Rows 0..D1-1   (the x1 block): [ Wv | Wk | 0  ]
    Rows D1..D1+D2 (the x2 block): [ 0  | 0  | Wq ]
    Column order [V | K | Q] keeps v lane-aligned with the output store.
    """
    wq, bq, wk, bk, wv, bv = (params[n] for n in ("wq", "bq", "wk", "bk", "wv", "bv"))
    D1, H = wk.shape
    D2 = wq.shape[0]
    cdt = jnp.dtype(compute_dtype) if compute_dtype is not None else wq.dtype

    top = jnp.concatenate([wv, wk, jnp.zeros((D1, H), wq.dtype)], axis=1)       # (D1, 3H)
    bot = jnp.concatenate([jnp.zeros((D2, 2 * H), wq.dtype), wq], axis=1)       # (D2, 3H)
    w = jnp.concatenate([top, bot], axis=0).astype(cdt)                         # (D1+D2, 3H)
    b = jnp.concatenate([bv, bk, bq], axis=0).reshape(1, 3 * H).astype(jnp.float32)
    return {"w": w, "b": b}


# ------------------------------------------------------------------------ wrapper
def self_attention_rewire(input1, input2, fused, *, tile_b=None):
    """input1: (B, dim_input), input2: (B, dim_input2) -> (B, dim_interaction)."""
    w, b = fused["w"], fused["b"]
    Din = w.shape[0]
    H = w.shape[1] // 3
    B, D1 = input1.shape
    B2, D2 = input2.shape
    assert B2 == B and D1 + D2 == Din

    out_dtype = input1.dtype
    cdt = w.dtype                                            # dtype fed into the MXU

    # Single fused input stream [x1 | x2].  (For a long-lived memory-bound
    # deployment, pre-concatenate upstream to avoid this extra HBM pass.)
    x = jnp.concatenate([input1.astype(cdt), input2.astype(cdt)], axis=-1)   # (B, Din)

    if tile_b is None:
        tile_b = _choose_tile_b(B, Din, H,
                                jnp.dtype(cdt).itemsize,
                                jnp.dtype(out_dtype).itemsize,
                                _vmem_budget())
    tile_b = max(8, (int(tile_b) // 8) * 8)

    # Constant-index weight/bias blocks: at large H, drop to a single buffer to
    # halve residency (matters on v7x's 64 MiB VMEM).  Not exercised at small H.
    big_w = w.size * jnp.dtype(cdt).itemsize > (4 << 20)
    if big_w:
        w_spec = pl.BlockSpec((Din, 3 * H), lambda i: (0, 0), pipeline_mode=pl.Buffered(1))
        b_spec = pl.BlockSpec((1, 3 * H), lambda i: (0, 0), pipeline_mode=pl.Buffered(1))
    else:
        w_spec = pl.BlockSpec((Din, 3 * H), lambda i: (0, 0))
        b_spec = pl.BlockSpec((1, 3 * H), lambda i: (0, 0))

    # No batch padding: Pallas masks the ragged last block (garbage rows are
    # per-row and never stored into the (B, H) output).
    grid = (pl.cdiv(B, tile_b),)

    return pl.pallas_call(
        _self_attn_rewire_kernel,
        out_shape=jax.ShapeDtypeStruct((B, H), out_dtype),
        grid_spec=pltpu.PrefetchScalarGridSpec(
            num_scalar_prefetch=0,
            grid=grid,
            in_specs=[
                pl.BlockSpec((tile_b, Din), lambda i: (i, 0)),   # fused [x1 | x2] tile
                w_spec,                                          # block-diag [Wv|Wk|Wq]
                b_spec,                                          # fused bias
            ],
            out_specs=pl.BlockSpec((tile_b, H), lambda i: (i, 0)),
        ),
        compiler_params=pltpu.CompilerParams(
            dimension_semantics=("parallel",)),                  # both TCs on v7x
    )(x, w, b)


# ----------------------------------------------------------------- init / reference
def init_params(key, dim_input, dim_input2, dim_interaction, dtype=jnp.float32):
    """Mimics torch.nn.Linear default init (uniform +/- 1/sqrt(fan_in)).
    Weights stored transposed: (in_features, out_features)."""
    ks = jax.random.split(key, 6)

    def lin(kw, kb, fan_in):
        bound = 1.0 / jnp.sqrt(fan_in)
        w = jax.random.uniform(kw, (fan_in, dim_interaction), dtype, -bound, bound)
        bb = jax.random.uniform(kb, (dim_interaction,), dtype, -bound, bound)
        return w, bb

    wq, bq = lin(ks[0], ks[1], dim_input2)
    wk, bk = lin(ks[2], ks[3], dim_input)
    wv, bv = lin(ks[4], ks[5], dim_input)
    return dict(wq=wq, bq=bq, wk=wk, bk=bk, wv=wv, bv=bv)


def _reference(input1, input2, p):
    q = jnp.tanh(input2 @ p["wq"] + p["bq"])
    k = jnp.tanh(input1 @ p["wk"] + p["bk"])
    v = input1 @ p["wv"] + p["bv"]
    qk = jax.nn.softmax(q * k, axis=-1)
    return qk * v


# --------------------------------------------------------------------------- main
if __name__ == "__main__":
    key = jax.random.PRNGKey(0)
    dim_input, dim_input2, dim_interaction = 16, 8, 32

    params = init_params(jax.random.fold_in(key, 123),
                         dim_input, dim_input2, dim_interaction)
    fused_f32 = fuse_params(params)                               # f32 MXU feed
    fused_bf16 = fuse_params(params, compute_dtype=jnp.bfloat16)  # bf16 MXU feed, f32 accum

    # Tolerances: approx EUP reciprocal (~1e-3 relative on the softmax denom) for
    # the f32 path; plus bf16 input/weight quantization for the bf16 path.
    tol_f32 = 5e-3
    tol_bf16 = 3e-2

    for batch in (64, 50):   # 50 exercises the ragged (unpadded) last block
        k1, k2 = jax.random.split(jax.random.fold_in(key, batch))
        input1 = jax.random.normal(k1, (batch, dim_input), jnp.float32)
        input2 = jax.random.normal(k2, (batch, dim_input2), jnp.float32)
        ref = _reference(input1, input2, params)

        out = jax.block_until_ready(self_attention_rewire(input1, input2, fused_f32))
        assert out.shape == (batch, dim_interaction)
        assert jnp.allclose(out, ref, atol=tol_f32, rtol=tol_f32), "f32 path mismatch"

        out_bf = jax.block_until_ready(self_attention_rewire(input1, input2, fused_bf16))
        assert out_bf.shape == (batch, dim_interaction)
        assert jnp.allclose(out_bf, ref, atol=tol_bf16, rtol=tol_bf16), "bf16 path mismatch"

    print("KERNEL_OK")
</pallas_src>

<mosaic_0001>
module attributes {stable_mosaic.version = 11 : i64} {
  func.func @_self_attn_rewire_kernel(%arg0: i32, %arg1: memref<32x24xf32, #tpu.memory_space<vmem>>, %arg2: memref<24x96xf32, #tpu.memory_space<vmem>>, %arg3: memref<1x96xf32, #tpu.memory_space<vmem>>, %arg4: memref<32x32xf32, #tpu.memory_space<vmem>>) attributes {dimension_semantics = [#tpu.dimension_semantics<parallel>], iteration_bounds = array<i64: 2>, scalar_prefetch = 0 : i64, scratch_operands = 0 : i64, tpu.core_type = #tpu.core_type<tc>, window_params = [{transform_indices = @transform_0, window_bounds = array<i64: 32, 24>}, {pipeline_mode = #tpu.pipeline_mode<synchronous>, transform_indices = @transform_1, window_bounds = array<i64: 24, 96>}, {pipeline_mode = #tpu.pipeline_mode<synchronous>, transform_indices = @transform_2, window_bounds = array<i64: 1, 96>}, {transform_indices = @transform_3, window_bounds = array<i64: 32, 32>}]} {
    %c0 = arith.constant 0 : index
    %c0_0 = arith.constant 0 : index
    %0 = vector.load %arg1[%c0, %c0_0] : memref<32x24xf32, #tpu.memory_space<vmem>>, vector<32x24xf32>
    %c0_1 = arith.constant 0 : index
    %c0_2 = arith.constant 0 : index
    %1 = vector.load %arg2[%c0_1, %c0_2] : memref<24x96xf32, #tpu.memory_space<vmem>>, vector<24x96xf32>
    %cst = arith.constant dense<0.000000e+00> : vector<32x96xf32>
    %2 = tpu.matmul %0, %1, %cst {dimension_numbers = #tpu.dot_dimension_numbers<[1], [0], [0], [1], [0, 0, 1, 1], [], []>} : vector<32x24xf32>, vector<24x96xf32>, vector<32x96xf32> -> vector<32x96xf32>
    %c0_3 = arith.constant 0 : index
    %c0_4 = arith.constant 0 : index
    %3 = vector.load %arg3[%c0_3, %c0_4] : memref<1x96xf32, #tpu.memory_space<vmem>>, vector<1x96xf32>
    %4 = vector.broadcast %3 : vector<1x96xf32> to vector<32x96xf32>
    %5 = arith.addf %2, %4 : vector<32x96xf32>
    %6 = vector.extract_strided_slice %5 {offsets = [0, 0], sizes = [32, 32], strides = [1, 1]} : vector<32x96xf32> to vector<32x32xf32>
    %7 = vector.extract_strided_slice %5 {offsets = [0, 32], sizes = [32, 32], strides = [1, 1]} : vector<32x96xf32> to vector<32x32xf32>
    %8 = math.tanh %7 : vector<32x32xf32>
    %9 = vector.extract_strided_slice %5 {offsets = [0, 64], sizes = [32, 32], strides = [1, 1]} : vector<32x96xf32> to vector<32x32xf32>
    %10 = math.tanh %9 : vector<32x32xf32>
    %11 = arith.mulf %10, %8 : vector<32x32xf32>
    %12 = math.exp %11 : vector<32x32xf32>
    %cst_5 = arith.constant dense<0.000000e+00> : vector<32xf32>
    %13 = vector.multi_reduction <add>, %12, %cst_5 [1] : vector<32x32xf32> to vector<32xf32>
    %14 = vector.shape_cast %13 : vector<32xf32> to vector<32x1xf32>
    %15 = tpu.reciprocal %14 {approx = true} : vector<32x1xf32> -> vector<32x1xf32>
    %16 = vector.broadcast %15 : vector<32x1xf32> to vector<32x32xf32>
    %17 = arith.mulf %12, %16 : vector<32x32xf32>
    %18 = arith.mulf %17, %6 : vector<32x32xf32>
    %c0_6 = arith.constant 0 : index
    %c0_7 = arith.constant 0 : index
    %19 = vector.load %arg4[%c0_6, %c0_7] : memref<32x32xf32, #tpu.memory_space<vmem>>, vector<32x32xf32>
    tpu.vector_store %arg4[%c0_6, %c0_7], %18 {strides = array<i32>} : memref<32x32xf32, #tpu.memory_space<vmem>>, vector<32x32xf32>,
    return
  }
  func.func @transform_0(%arg0: i32) -> (i32, i32) {
    %c0_i32 = arith.constant 0 : i32
    %c0_i32_0 = arith.constant 0 : i32
    return %arg0, %c0_i32 : i32, i32
  }
  func.func @transform_1(%arg0: i32) -> (i32, i32) {
    %c0_i32 = arith.constant 0 : i32
    %c0_i32_0 = arith.constant 0 : i32
    %c0_i32_1 = arith.constant 0 : i32
    return %c0_i32, %c0_i32_0 : i32, i32
  }
  func.func @transform_2(%arg0: i32) -> (i32, i32) {
    %c0_i32 = arith.constant 0 : i32
    %c0_i32_0 = arith.constant 0 : i32
    %c0_i32_1 = arith.constant 0 : i32
    return %c0_i32, %c0_i32_0 : i32, i32
  }
  func.func @transform_3(%arg0: i32) -> (i32, i32) {
    %c0_i32 = arith.constant 0 : i32
    %c0_i32_0 = arith.constant 0 : i32
    return %arg0, %c0_i32 : i32, i32
  }
}

</mosaic_0001>

<llo_original>
// kernel: tpu_custom_call.1
$region0: #{tpu_custom_call.1}
  #allocation0 [shape = 'u32[]', space=smem, size = 0x4, offset = 0x4, fixed_abs, tag = 'smem constant byte address 0x4 - core index']
  #allocation1 [shape = 'u32[144,128]{1,0:T(1,128)}', space=vmem, size = 0x12000, scoped, tag = 'internal scratch']
  %s0 = inlined_call_operand.vmem [shape: f32[64,24], index: 0, kind: input, shape index: {}]
  %s1 = inlined_call_operand.vmem [shape: f32[24,96], index: 1, kind: input, shape index: {}]
  %s2 = inlined_call_operand.vmem [shape: f32[1,96], index: 2, kind: input, shape index: {}]
  %s3 = inlined_call_operand.vmem [shape: f32[64,32], index: 3, kind: output, shape index: {}]
  %s4 = sld [smem:[#allocation0]]
  $region45: #{tpu_custom_call.1} parent=0
    _
  %s6 = ssub.s32 1, %s4
  %s7 = scalar_select 0, %s6, %s4
  loop: start=0, step=1, limit=4
  $region2: #{tpu_custom_call.1} parent=0 // loop_pre_header
    _
  $region3: #{tpu_custom_call.1} parent=0 // loop_header
    %s9 = sphi 0, %s13
    %p10 = scmp.ge.s32.totalorder %s9, 4
    %s19 = sphi 0, %s21
    %s22 = sphi 0, %s19
    %s23 = sphi 0, %s22
    %s39 = sphi 0, %s23
    %s43 = sphi 0, %s43
    %s45 = sphi 0, %s43
    %s46 = sphi 0, %s45
    %s60 = sphi 0, %s46
    %s64 = sphi 0, %s64
    %s66 = sphi 0, %s64
    %s67 = sphi 0, %s66
    %s81 = sphi 0, %s67
    %s87 = sphi 0, %s89
    %s90 = sphi 0, %s87
    %s91 = sphi 0, %s90
    %s107 = sphi 0, %s91
  $region4: #{tpu_custom_call.1} parent=0 // loop_header_branch
    %12 = sbr.rel (%p10) target = $region8
  $region5: #{tpu_custom_call.1} parent=0 // loop_body
    %s14 = ssub.s32 %s9, 1
    %s15 = ssub.s32 %s9, 2
    %s16 = sadd.s32 %s9, 1
    %s17 = ssub.s32 %s9, %s16
    %p18 = scmp.eq.s32.totalorder %s17, 0
    %s20 = sadd.s32 %s19, 1
    %s21 = scalar_select %p18, %s19, %s20
    %p24 = pneg %p18
    %p25 = scmp.eq.s32.totalorder %s9, 1
    %p26 = por %p24, %p25
    %p27 = scmp.ne.s32.totalorder %s19, %s22
    %p28 = scmp.eq.s32.totalorder %s9, 0
    %p29 = por %p27, %p28
    %p30 = scmp.ne.s32.totalorder %s19, %s22
    %p31 = scmp.eq.s32.totalorder %s14, 1
    %p32 = por %p30, %p31
    %p33 = scmp.ne.s32.totalorder %s22, %s23
    %p34 = scmp.eq.s32.totalorder %s14, 0
    %p35 = por %p33, %p34
    %p36 = scmp.ne.s32.totalorder %s22, %s23
    %p37 = scmp.eq.s32.totalorder %s15, 1
    %p38 = por %p36, %p37
    %p40 = scmp.ne.s32.totalorder %s23, %s39
    %p41 = scmp.eq.s32.totalorder %s15, 0
    %p42 = por %p40, %p41
    %s44 = sadd.s32 %s43, 1
    %p47 = scmp.eq.s32.totalorder %s9, 1
    %p48 = scmp.ne.s32.totalorder %s43, %s45
    %p49 = scmp.eq.s32.totalorder %s9, 0
    %p50 = por %p48, %p49
    %p51 = scmp.ne.s32.totalorder %s43, %s45
    %p52 = scmp.eq.s32.totalorder %s14, 1
    %p53 = por %p51, %p52
    %p54 = scmp.ne.s32.totalorder %s45, %s46
    %p55 = scmp.eq.s32.totalorder %s14, 0
    %p56 = por %p54, %p55
    %p57 = scmp.ne.s32.totalorder %s45, %s46
    %p58 = scmp.eq.s32.totalorder %s15, 1
    %p59 = por %p57, %p58
    %p61 = scmp.ne.s32.totalorder %s46, %s60
    %p62 = scmp.eq.s32.totalorder %s15, 0
    %p63 = por %p61, %p62
    %s65 = sadd.s32 %s64, 1
    %p68 = scmp.eq.s32.totalorder %s9, 1
    %p69 = scmp.ne.s32.totalorder %s64, %s66
    %p70 = scmp.eq.s32.totalorder %s9, 0
    %p71 = por %p69, %p70
    %p72 = scmp.ne.s32.totalorder %s64, %s66
    %p73 = scmp.eq.s32.totalorder %s14, 1
    %p74 = por %p72, %p73
    %p75 = scmp.ne.s32.totalorder %s66, %s67
    %p76 = scmp.eq.s32.totalorder %s14, 0
    %p77 = por %p75, %p76
    %p78 = scmp.ne.s32.totalorder %s66, %s67
    %p79 = scmp.eq.s32.totalorder %s15, 1
    %p80 = por %p78, %p79
    %p82 = scmp.ne.s32.totalorder %s67, %s81
    %p83 = scmp.eq.s32.totalorder %s15, 0
    %p84 = por %p82, %p83
    %s85 = ssub.s32 %s9, %s16
    %p86 = scmp.eq.s32.totalorder %s85, 0
    %s88 = sadd.s32 %s87, 1
    %s89 = scalar_select %p86, %s87, %s88
    %p92 = pneg %p86
    %p93 = scmp.eq.s32.totalorder %s9, 1
    %p94 = por %p92, %p93
    %p95 = scmp.ne.s32.totalorder %s87, %s90
    %p96 = scmp.eq.s32.totalorder %s9, 0
    %p97 = por %p95, %p96
    %p98 = scmp.ne.s32.totalorder %s87, %s90
    %p99 = scmp.eq.s32.totalorder %s14, 1
    %p100 = por %p98, %p99
    %p101 = scmp.ne.s32.totalorder %s90, %s91
    %p102 = scmp.eq.s32.totalorder %s14, 0
    %p103 = por %p101, %p102
    %p104 = scmp.ne.s32.totalorder %s90, %s91
    %p105 = scmp.eq.s32.totalorder %s15, 1
    %p106 = por %p104, %p105
    %p108 = scmp.ne.s32.totalorder %s91, %s107
    %p109 = scmp.eq.s32.totalorder %s15, 0
    %p110 = por %p108, %p109
    %p111 = scmp.le.s32.totalorder 1, %s9
    %p112 = scmp.lt.s32.totalorder %s9, 3
    %p113 = pnand %p111, %p112
    %p114 = pneg %p113
    // Predicated region
    $region9: #{tpu_custom_call.1} parent=5 // pred_check
      _
    $region10: #{tpu_custom_call.1} parent=5 // pred_check_branch
      %116 = sbr.rel (%p113) target = $region12
    $region11: #{tpu_custom_call.1} parent=5 // pred_region
      %s117 = ssub.s32 %s9, 1
      // Predicated region
      $region13: #{tpu_custom_call.1} parent=11 // pred_check
        %p118 = pneg %p56
      $region14: #{tpu_custom_call.1} parent=11 // pred_check_branch
        %120 = sbr.rel (%p118) target = $region16
      $region15: #{tpu_custom_call.1} parent=11 // pred_region
        _
      $region16: #{tpu_custom_call.1} parent=11 // pred_fallthru
        _
      // Predicated region
      $region17: #{tpu_custom_call.1} parent=11 // pred_check
        %p121 = pneg %p77
      $region18: #{tpu_custom_call.1} parent=11 // pred_check_branch
        %123 = sbr.rel (%p121) target = $region20
      $region19: #{tpu_custom_call.1} parent=11 // pred_region
        _
      $region20: #{tpu_custom_call.1} parent=11 // pred_fallthru
        _
    $region12: #{tpu_custom_call.1} parent=5 // pred_fallthru
      _
    %p124 = scmp.lt.s32.totalorder %s9, 2
    // Predicated region
    $region21: #{tpu_custom_call.1} parent=5 // pred_check
      %p125 = pneg %p124
    $region22: #{tpu_custom_call.1} parent=5 // pred_check_branch
      %127 = sbr.rel (%p125) target = $region24
    $region23: #{tpu_custom_call.1} parent=5 // pred_region
      // Predicated region
      $region25: #{tpu_custom_call.1} parent=23 // pred_check
        %p128 = pneg %p29
      $region26: #{tpu_custom_call.1} parent=23 // pred_check_branch
        %130 = sbr.rel (%p128) target = $region28
      $region27: #{tpu_custom_call.1} parent=23 // pred_region
        %s131 = smul.u32 4, %s9
        %p132 = scmp.lt.s32.totalorder %s131, 7
        %s133 = scalar_select %p132, %s131, 7
        %s134 = smul.addr %s133, 8
        %s135 = scalar_lea.vmem %s0, %s134
        %s136 = smul.u32 4, %s9
      $region28: #{tpu_custom_call.1} parent=23 // pred_fallthru
        _
    $region24: #{tpu_custom_call.1} parent=5 // pred_fallthru
      _
    %p137 = scmp.le.s32.totalorder 1, %s9
    %p138 = scmp.lt.s32.totalorder %s9, 3
    %p139 = pnand %p137, %p138
    %p140 = pneg %p139
    // Predicated region
    $region29: #{tpu_custom_call.1} parent=5 // pred_check
      _
    $region30: #{tpu_custom_call.1} parent=5 // pred_check_branch
      %142 = sbr.rel (%p139) target = $region32
    $region31: #{tpu_custom_call.1} parent=5 // pred_region
      %s143 = ssub.s32 %s9, 1
      %s144 = smul.u32 4, %s14
      %p145 = scmp.lt.s32.totalorder %s144, 7
      %s146 = scalar_select %p145, %s144, 7
      %s147 = smul.addr %s146, 8
      %s148 = scalar_lea.vmem %s0, %s147
      %p149 = pneg %p35
      %p150 = pneg %p32
      %p151 = pneg %p56
      %p152 = pneg %p53
      %p153 = pneg %p77
      %p154 = pneg %p74
      %p155 = pneg %p103
      %p156 = pneg %p100
      %s157 = smul.u32 4, %s14
      %p158 = scmp.lt.s32.totalorder %s157, 7
      %s159 = scalar_select %p158, %s157, 7
      %s160 = smul.addr %s159, 8
      %s161 = scalar_lea.vmem %s3, %s160
      %s162 = smul.u32 4, %s14
      %p163 = scmp.lt.s32.totalorder %s162, 7
      %s164 = scalar_select %p163, %s162, 7
      %s165 = smul.addr %s164, 8
      %s166 = scalar_lea.vmem %s0, %s165
      %s167 = smul.u32 4, %s14
      %s168 = smul.u32 4, %s14
      %p169 = scmp.lt.s32.totalorder %s168, 7
      %s170 = scalar_select %p169, %s168, 7
      %s171 = smul.addr %s170, 8
      %s172 = scalar_lea.vmem %s3, %s171
      %s173 = smul.u32 4, %s14
      %v174 = vld [vmem:[%s166] sm:$0xff]
      %v175 = vld [vmem:[%s166 + $0x8] sm:$0xff]
      %v176 = vld [vmem:[%s166 + $0x10] sm:$0xff]
      %v177 = vld [vmem:[%s166 + $0x18] sm:$0xff]
      %v178 = vld [vmem:[%s1] sm:$0xff]
      %v179 = vld [vmem:[%s1 + $0x8] sm:$0xff]
      %v180 = vld [vmem:[%s1 + $0x10] sm:$0xff]
      %v181 = vld [vmem:[%s2] sm:$0x1]
      %v183 = vlaneseq
      %v184 = vshrl.u32 %v183, 7
      %v185 = vsub.s32 0, %v184
      %v186 = vrot.slane %v181, %v185
      %vm188 = vcmask 195584
      %v190 = vsel %vm188, %v174, 0
      %v193 = vsel %vm188, %v175, 0
      %v196 = vsel %vm188, %v176, 0
      %v199 = vsel %vm188, %v177, 0
      %201 = vmatprep.subr.mxu0 0.0
      %202 = vmatpush1.msra.mxu0 0.0
      %203 = vmatprep.subr.mxu0 0.0
      %204 = vmatpush1.msra.mxu0 0.0
      %205 = vmatprep.subr.mxu0 0.0
      %206 = vmatpush1.msra.mxu0 0.0
      %207 = vmatprep.subr.mxu0 0.0
      %208 = vmatpush1.msra.mxu0 0.0
      %209 = vmatprep.subr.mxu0 0.0
      %210 = vmatpush1.msra.mxu0 0.0
      %211 = vmatprep.subr.mxu0 0.0
      %212 = vmatpush1.msra.mxu0 0.0
      %213 = vmatprep.subr.mxu0 0.0
      %214 = vmatpush1.msra.mxu0 0.0
      %215 = vmatprep.subr.mxu0 0.0
      %216 = vmatpush1.msra.mxu0 0.0
      %217 = vmatprep.subr.mxu0 0.0
      %218 = vmatpush1.msra.mxu0 0.0
      %219 = vmatprep.subr.mxu0 0.0
      %220 = vmatpush1.msra.mxu0 0.0
      %221 = vmatprep.subr.mxu0 0.0
      %222 = vmatpush1.msra.mxu0 0.0
      %223 = vmatprep.subr.mxu0 0.0
      %224 = vmatpush1.msra.mxu0 0.0
      %225 = vmatprep.subr.mxu0 0.0
      %226 = vmatpush1.msra.mxu0 0.0
      %227 = vmatprep.subr.mxu0 0.0
      %228 = vmatpush1.msra.mxu0 %v180
      %229 = vmatprep.subr.mxu0 0.0
      %230 = vmatpush1.msra.mxu0 %v179
      %231 = vmatprep.subr.mxu0 0.0
      %232 = vmatpush1.msra.mxu0 %v178
      %233 = vmatprep.subr.mxu0 0.0
      %234 = vmatpush2.msra.mxu0 0.0
      %235 = vmatprep.subr.mxu0 0.0
      %236 = vmatpush2.msra.mxu0 0.0
      %237 = vmatprep.subr.mxu0 0.0
      %238 = vmatpush2.msra.mxu0 0.0
      %239 = vmatprep.subr.mxu0 0.0
      %240 = vmatpush2.msra.mxu0 0.0
      %241 = vmatprep.subr.mxu0 0.0
      %242 = vmatpush2.msra.mxu0 0.0
      %243 = vmatprep.subr.mxu0 0.0
      %244 = vmatpush2.msra.mxu0 0.0
      %245 = vmatprep.subr.mxu0 0.0
      %246 = vmatpush2.msra.mxu0 0.0
      %247 = vmatprep.subr.mxu0 0.0
      %248 = vmatpush2.msra.mxu0 0.0
      %249 = vmatprep.subr.mxu0 0.0
      %250 = vmatpush2.msra.mxu0 0.0
      %251 = vmatprep.subr.mxu0 0.0
      %252 = vmatpush2.msra.mxu0 0.0
      %253 = vmatprep.subr.mxu0 0.0
      %254 = vmatpush2.msra.mxu0 0.0
      %255 = vmatprep.subr.mxu0 0.0
      %256 = vmatpush2.msra.mxu0 0.0
      %257 = vmatprep.subr.mxu0 0.0
      %258 = vmatpush2.msra.mxu0 0.0
      %259 = vmatprep.subr.mxu0 0.0
      %260 = vmatpush2.msra.mxu0 0.0
      %261 = vmatprep.subr.mxu0 0.0
      %262 = vmatpush2.msra.mxu0 0.0
      %263 = vmatprep.subr.mxu0 0.0
      %264 = vmatpush2.msra.mxu0 0.0
      %265 = vmatprep.mubr.f32.mxu0 0.0
      %266 = vmatmul.mubr.f32.gmra.mxu0 %v190
      %v267 = vpop.f32.mrf.mxu0
      %v268 = vadd.f32 %v186, %v267
      %v269 = vpop.f32.mrf.mxu0
      %270 = vmatprep.mubr.f32.mxu0 0.0
      %271 = vmatmul.mubr.f32.gmra.mxu0 %v193
      %v272 = vpop.f32.mrf.mxu0
      %v273 = vadd.f32 %v186, %v272
      %v274 = vpop.f32.mrf.mxu0
      %275 = vmatprep.mubr.f32.mxu0 0.0
      %276 = vmatmul.mubr.f32.gmra.mxu0 %v196
      %v277 = vpop.f32.mrf.mxu0
      %v278 = vadd.f32 %v186, %v277
      %v279 = vpop.f32.mrf.mxu0
      %280 = vmatprep.mubr.f32.mxu0 0.0
      %281 = vmatmul.mubr.f32.gmra.mxu0 %v199
      %v282 = vpop.f32.mrf.mxu0
      %v283 = vadd.f32 %v186, %v282
      %v284 = vpop.f32.mrf.mxu0
      %285 = vdwg.mxu0
      %v286 = vtanh.pop %v268
      %v287 = vtanh.pop %v273
      %v288 = vtanh.pop %v278
      %v289 = vtanh.pop %v283
      %294 = vrot.lane.b32.xlu0 %v286, 32
      %v295 = vpop.permute.xlu0 %294
      %296 = vrot.lane.b32.xlu0 %v287, 32
      %v297 = vpop.permute.xlu0 %296
      %298 = vrot.lane.b32.xlu0 %v288, 32
      %v299 = vpop.permute.xlu0 %298
      %300 = vrot.lane.b32.xlu0 %v289, 32
      %v301 = vpop.permute.xlu0 %300
      %v306 = vmul.f32 %v286, %v295
      %v307 = vmul.f32 %v287, %v297
      %v308 = vmul.f32 %v288, %v299
      %v309 = vmul.f32 %v289, %v301
      %v310 = vmul.f32 %v306, 1.442695
      %v311 = vpow.pop %v310
      %v312 = vmul.f32 %v307, 1.442695
      %v313 = vpow.pop %v312
      %v314 = vmul.f32 %v308, 1.442695
      %v315 = vpow.pop %v314
      %v316 = vmul.f32 %v309, 1.442695
      %v317 = vpow.pop %v316
      %322 = vrot.lane.b32.xlu0 %v311, 64
      %v323 = vpop.permute.xlu0 %322
      %324 = vrot.lane.b32.xlu0 %v313, 64
      %v325 = vpop.permute.xlu0 %324
      %326 = vrot.lane.b32.xlu0 %v315, 64
      %v327 = vpop.permute.xlu0 %326
      %328 = vrot.lane.b32.xlu0 %v317, 64
      %v329 = vpop.permute.xlu0 %328
      %vm334 = vcmask 261120
      %v335 = vsel %vm334, %v323, 0.0
      %336 = vadd.xlane.f32.xlu0 %v335
      %v337 = vpop.xlane.xlu0 %336
      %v338 = vsel %vm334, %v325, 0.0
      %339 = vadd.xlane.f32.xlu0 %v338
      %v340 = vpop.xlane.xlu0 %339
      %v341 = vsel %vm334, %v327, 0.0
      %342 = vadd.xlane.f32.xlu0 %v341
      %v343 = vpop.xlane.xlu0 %342
      %v344 = vsel %vm334, %v329, 0.0
      %345 = vadd.xlane.f32.xlu0 %v344
      %v346 = vpop.xlane.xlu0 %345
      %v347 = vrcp.pop %v337
      %v348 = vrcp.pop %v340
      %v349 = vrcp.pop %v343
      %v350 = vrcp.pop %v346
      %v351 = vmul.f32 %v311, %v347
      %v352 = vmul.f32 %v313, %v348
      %v353 = vmul.f32 %v315, %v349
      %v354 = vmul.f32 %v317, %v350
      %359 = vrot.lane.b32.xlu0 %v268, 64
      %v360 = vpop.permute.xlu0 %359
      %361 = vrot.lane.b32.xlu0 %v273, 64
      %v362 = vpop.permute.xlu0 %361
      %363 = vrot.lane.b32.xlu0 %v278, 64
      %v364 = vpop.permute.xlu0 %363
      %365 = vrot.lane.b32.xlu0 %v283, 64
      %v366 = vpop.permute.xlu0 %365
      %v371 = vmul.f32 %v351, %v360
      %v372 = vmul.f32 %v352, %v362
      %v373 = vmul.f32 %v353, %v364
      %v374 = vmul.f32 %v354, %v366
      %379 = vrot.lane.b32.xlu0 %v371, 64
      %v380 = vpop.permute.xlu0 %379
      %381 = vrot.lane.b32.xlu0 %v372, 64
      %v382 = vpop.permute.xlu0 %381
      %383 = vrot.lane.b32.xlu0 %v373, 64
      %v384 = vpop.permute.xlu0 %383
      %385 = vrot.lane.b32.xlu0 %v374, 64
      %v386 = vpop.permute.xlu0 %385
      %391 = vst.msk [vmem:[%s172] sm:$0xff] %vm334, %v380
      %392 = vst.msk [vmem:[%s172 + $0x8] sm:$0xff] %vm334, %v382
      %393 = vst.msk [vmem:[%s172 + $0x10] sm:$0xff] %vm334, %v384
      %394 = vst.msk [vmem:[%s172 + $0x18] sm:$0xff] %vm334, %v386
      %s395 = smul.u32 4, %s14
      %p396 = scmp.lt.s32.totalorder %s395, 7
      %s397 = scalar_select %p396, %s395, 7
      %s398 = smul.addr %s397, 8
      %s399 = scalar_lea.vmem %s3, %s398
      // Predicated region
      $region33: #{tpu_custom_call.1} parent=31 // pred_check
        %p400 = pneg %p100
      $region34: #{tpu_custom_call.1} parent=31 // pred_check_branch
        %402 = sbr.rel (%p400) target = $region36
      $region35: #{tpu_custom_call.1} parent=31 // pred_region
        %s403 = smul.u32 4, %s14
      $region36: #{tpu_custom_call.1} parent=31 // pred_fallthru
        _
    $region32: #{tpu_custom_call.1} parent=5 // pred_fallthru
      _
    %p404 = scmp.le.s32.totalorder 2, %s9
    // Predicated region
    $region37: #{tpu_custom_call.1} parent=5 // pred_check
      %p405 = pneg %p404
    $region38: #{tpu_custom_call.1} parent=5 // pred_check_branch
      %407 = sbr.rel (%p405) target = $region40
    $region39: #{tpu_custom_call.1} parent=5 // pred_region
      %s408 = ssub.s32 %s9, 2
      // Predicated region
      $region41: #{tpu_custom_call.1} parent=39 // pred_check
        %p409 = pneg %p106
      $region42: #{tpu_custom_call.1} parent=39 // pred_check_branch
        %411 = sbr.rel (%p409) target = $region44
      $region43: #{tpu_custom_call.1} parent=39 // pred_region
        %s412 = smul.u32 4, %s15
        %p413 = scmp.lt.s32.totalorder %s412, 7
        %s414 = scalar_select %p413, %s412, 7
        %s415 = smul.addr %s414, 8
        %s416 = scalar_lea.vmem %s3, %s415
      $region44: #{tpu_custom_call.1} parent=39 // pred_fallthru
        _
    $region40: #{tpu_custom_call.1} parent=5 // pred_fallthru
      _
  $region6: #{tpu_custom_call.1} parent=0 // loop_footer
    %s13 = sadd.s32 1, %s9
  $region7: #{tpu_custom_call.1} parent=0 // loop_footer_branch
    %8 = sbr.rel target = $region3
  $region8: #{tpu_custom_call.1} parent=0 // loop_exit
    _

</llo_original>
